<compile_context>
chip_gen: v7x
topology: tpu7x:2x2x1
jax: 0.10.0
libtpu: 0.0.40
codegen_flags: <defaults>
</compile_context>

<pallas_src>
import functools

import numpy as np
import jax
import jax.numpy as jnp
from jax.experimental import pallas as pl
from jax.experimental.pallas import tpu as pltpu


# ----------------------------------------------------------------------------
# Kernel
# ----------------------------------------------------------------------------
def _rff_conv1d_kernel(xcol_ref, w_ref, b_ref, o_ref, *, norm_scale, function):
    """One (batch, L_out-tile, O-tile) grid step.

    xcol_ref : (1, K*C, TL)   VMEM  im2col slice of the input (compute dtype)
    w_ref    : (TO, K*C)      VMEM  conv weight / kernel_scale, taps flattened
    b_ref    : (TO, 1)        VMEM  f32 bias
    o_ref    : (1, TO, TL)    VMEM  output tile, lane-dense along L_out
    """
    # Single fused MXU matmul over all K*C (tap, channel) pairs; f32 accumulate.
    acc = jnp.dot(w_ref[...], xcol_ref[0],
                  preferred_element_type=jnp.float32)          # (TO, TL)
    acc = acc + b_ref[...]                                     # broadcast over lanes
    if function:
        out = jnp.cos(acc)
    else:
        # Bug-compatible with the PyTorch module: `acc % 2 == 0` is only true on
        # a measure-zero set of float values, so this effectively selects sin().
        out = jnp.where((acc % 2.0) == 0.0, jnp.cos(acc), jnp.sin(acc))
    if norm_scale != 1.0:
        out = norm_scale * out
    o_ref[0] = out.astype(o_ref.dtype)


# ----------------------------------------------------------------------------
# Tiling helpers
# ----------------------------------------------------------------------------
def _pick_tile(dim, max_tile, granule):
    """Largest legal tile: either the full dim, or a multiple of `granule`."""
    if dim <= max_tile:
        return dim
    return max(granule, (max_tile // granule) * granule)


def _vmem_capacity_bytes():
    """Per-core VMEM capacity; conservative fallback (v7x = 64 MiB / TC)."""
    try:
        info = pltpu.get_tpu_info()
        cap = getattr(info, "vmem_capacity_bytes", None)
        if cap:
            return int(cap)
    except Exception:
        pass
    return 64 * 1024 * 1024


def _choose_tiles(kc, o_dim, l_pad, in_bytes, out_bytes, tl_max, to_max, budget):
    """Pick (TL, TO) as big as possible within the double-buffered VMEM budget."""
    tl = _pick_tile(l_pad, tl_max, 128)
    to = _pick_tile(o_dim, to_max, 8)

    def footprint(tl_, to_):
        per_step = (kc * tl_ * in_bytes          # x_col tile
                    + to_ * kc * in_bytes        # weight tile
                    + to_ * 4                    # bias tile
                    + to_ * tl_ * out_bytes)     # output tile
        return 2 * per_step                      # double buffering

    while footprint(tl, to) > budget:
        if tl > 512:
            tl = max(512, _pick_tile(l_pad, tl // 2, 128))
        elif to > 128:
            to = max(8, _pick_tile(o_dim, to // 2, 8))
        elif tl > 128:
            tl = _pick_tile(l_pad, tl // 2, 128)
        elif to > 8:
            to = _pick_tile(o_dim, to // 2, 8)
        else:
            break
    return tl, to, footprint(tl, to)


# ----------------------------------------------------------------------------
# Forward wrapper
# ----------------------------------------------------------------------------
def conv1d_rff_forward(x_ncl, kernel_ock, bias_o, kernel_scale,
                       normalization=True, function=True,
                       compute_dtype=jnp.bfloat16,
                       out_dtype=jnp.float32,
                       tl_max=2048, to_max=512):
    """Pallas forward pass of Conv1dRFF_PT.

    x_ncl        : (N, C_in, L)  float32   (PyTorch NCL layout)
    kernel_ock   : (O, C_in, K)  float32   (PyTorch conv1d weight layout)
    bias_o       : (O,)          float32
    kernel_scale : scalar float
    returns      : (N, O, L_out) out_dtype with L_out = L - K + 1 (VALID padding)
    """
    n, c_in, l = x_ncl.shape
    o_dim, c_in_w, k = kernel_ock.shape
    assert c_in == c_in_w
    l_out = l - k + 1
    assert l_out >= 1
    kc = c_in * k

    # Pad L_out up to a lane-dense multiple of 128 (unmasked stores). Only pad
    # when L_out is small; for large ragged L_out the wrapper-side slice copy
    # would cost more than the masked stores it removes.
    if (l_out % 128 != 0) and (l_out < 1024):
        l_pad = ((l_out + 127) // 128) * 128
    else:
        l_pad = l_out

    # --- wrapper glue ---
    # Cast BEFORE the im2col stack so the staged x_col is already compute_dtype.
    x_c = x_ncl.astype(compute_dtype)
    # im2col: x_col[n, c*K + t, l] = x[n, c, l + t]
    x_col = jnp.stack([x_c[:, :, t:t + l_out] for t in range(k)], axis=2)
    x_col = x_col.reshape(n, kc, l_out)                              # (N, K*C, L_out)
    if l_pad != l_out:
        x_col = jnp.pad(x_col, ((0, 0), (0, 0), (0, l_pad - l_out)))

    # Fold 1/kernel_scale into the weights; flatten taps to match x_col rows.
    w2d = (kernel_ock.astype(jnp.float32) / kernel_scale).reshape(o_dim, kc)
    w2d = w2d.astype(compute_dtype)                                  # (O, K*C)
    b_2d = bias_o.reshape(o_dim, 1).astype(jnp.float32)              # (O, 1)

    norm_scale = float(np.sqrt(2.0 / o_dim)) if normalization else 1.0

    # Generation-aware tile sizes / VMEM limits.
    in_bytes = jnp.dtype(compute_dtype).itemsize
    out_bytes = jnp.dtype(out_dtype).itemsize
    vmem_cap = _vmem_capacity_bytes()
    budget = int(vmem_cap * 0.4)
    tl, to, footprint = _choose_tiles(kc, o_dim, l_pad, in_bytes, out_bytes,
                                      tl_max, to_max, budget)
    vmem_limit = int(min(vmem_cap * 0.75, max(footprint + (8 << 20), 32 << 20)))

    # O axis innermost: x_col tile (depends on (b, j) only) stays VMEM-resident
    # across all O tiles; only the small weight/bias tiles are re-fetched.
    grid = (n, pl.cdiv(l_pad, tl), pl.cdiv(o_dim, to))

    kernel_fn = functools.partial(_rff_conv1d_kernel,
                                  norm_scale=norm_scale,
                                  function=bool(function))

    out_nol = pl.pallas_call(
        kernel_fn,
        out_shape=jax.ShapeDtypeStruct((n, o_dim, l_pad), out_dtype),
        grid_spec=pltpu.PrefetchScalarGridSpec(
            num_scalar_prefetch=0,
            grid=grid,
            in_specs=[
                pl.BlockSpec((1, kc, tl), lambda b, j, o: (b, 0, j)),   # x_col
                pl.BlockSpec((to, kc),    lambda b, j, o: (o, 0)),      # weights
                pl.BlockSpec((to, 1),     lambda b, j, o: (o, 0)),      # bias
            ],
            out_specs=pl.BlockSpec((1, to, tl), lambda b, j, o: (b, o, j)),
        ),
        compiler_params=pltpu.CompilerParams(
            dimension_semantics=("parallel", "parallel", "parallel"),
            vmem_limit_bytes=vmem_limit),
    )(x_col, w2d, b_2d)

    # Already in the PyTorch (N, O, L_out) layout; drop lane padding if any.
    if l_pad != l_out:
        out_nol = out_nol[:, :, :l_out]
    return out_nol


# ----------------------------------------------------------------------------
# Pure-JAX reference (mirrors F.conv1d + cos path) for verification
# ----------------------------------------------------------------------------
def _reference_forward(x_ncl, kernel_ock, bias_o, kernel_scale):
    w = kernel_ock / kernel_scale
    y = jax.lax.conv_general_dilated(
        x_ncl, w, window_strides=(1,), padding="VALID",
        dimension_numbers=("NCH", "OIH", "NCH"))
    y = y + bias_o[None, :, None]
    return jnp.sqrt(2.0 / kernel_ock.shape[0]) * jnp.cos(y)


if __name__ == "__main__":
    # Small shapes consistent with Conv1dRFF_PT: batch=2, input_dim=4, length=16.
    N, C_IN, L = 2, 4, 16
    OUTPUT_DIM, KERNEL_SIZE = 32, 3

    key = jax.random.PRNGKey(0)
    kx, kw, kb = jax.random.split(key, 3)

    x = jax.random.normal(kx, (N, C_IN, L), dtype=jnp.float32)
    # Deterministic parameter "lazy init" (module __init__/first-forward shapes):
    kernel = jax.random.normal(kw, (OUTPUT_DIM, C_IN, KERNEL_SIZE),
                               dtype=jnp.float32)            # 'gaussian' init
    bias = jax.random.uniform(kb, (OUTPUT_DIM,), dtype=jnp.float32,
                              minval=0.0, maxval=2.0 * np.pi)
    kernel_scale = float(np.sqrt(C_IN * KERNEL_SIZE ** 2 / 2.0))

    ref = _reference_forward(x, kernel, bias, kernel_scale)

    # 1) Exact-precision path (f32 MXU inputs) must match the reference tightly.
    out_f32 = conv1d_rff_forward(x, kernel, bias, kernel_scale,
                                 compute_dtype=jnp.float32)
    out_f32 = jax.block_until_ready(out_f32)
    assert out_f32.shape == (N, OUTPUT_DIM, L - KERNEL_SIZE + 1)
    np.testing.assert_allclose(np.asarray(out_f32), np.asarray(ref),
                               rtol=1e-5, atol=1e-5)

    # 2) Fast path (bf16 MXU inputs, f32 accumulation): tolerance bounded by
    #    bf16 quantization of the matmul inputs only.
    out_bf16 = conv1d_rff_forward(x, kernel, bias, kernel_scale,
                                  compute_dtype=jnp.bfloat16)
    out_bf16 = jax.block_until_ready(out_bf16)
    np.testing.assert_allclose(np.asarray(out_bf16), np.asarray(ref),
                               rtol=0.0, atol=1e-2)

    print("KERNEL_OK")
</pallas_src>

<mosaic_0001>
module attributes {stable_mosaic.version = 11 : i64} {
  func.func @_rff_conv1d_kernel(%arg0: i32, %arg1: i32, %arg2: i32, %arg3: memref<1x12x128xf32, #tpu.memory_space<vmem>>, %arg4: memref<32x12xf32, #tpu.memory_space<vmem>>, %arg5: memref<32x1xf32, #tpu.memory_space<vmem>>, %arg6: memref<1x32x128xf32, #tpu.memory_space<vmem>>) attributes {dimension_semantics = [#tpu.dimension_semantics<parallel>, #tpu.dimension_semantics<parallel>, #tpu.dimension_semantics<parallel>], iteration_bounds = array<i64: 2, 1, 1>, scalar_prefetch = 0 : i64, scratch_operands = 0 : i64, tpu.core_type = #tpu.core_type<tc>, window_params = [{transform_indices = @transform_0, window_bounds = array<i64: 1, 12, 128>}, {transform_indices = @transform_1, window_bounds = array<i64: 32, 12>}, {transform_indices = @transform_2, window_bounds = array<i64: 32, 1>}, {transform_indices = @transform_3, window_bounds = array<i64: 1, 32, 128>}]} {
    %c0 = arith.constant 0 : index
    %c0_0 = arith.constant 0 : index
    %0 = vector.load %arg4[%c0, %c0_0] : memref<32x12xf32, #tpu.memory_space<vmem>>, vector<32x12xf32>
    %c0_1 = arith.constant 0 : index
    %c0_2 = arith.constant 0 : index
    %c0_3 = arith.constant 0 : index
    %1 = vector.load %arg3[%c0_1, %c0_2, %c0_3] : memref<1x12x128xf32, #tpu.memory_space<vmem>>, vector<1x12x128xf32>
    %2 = vector.shape_cast %1 : vector<1x12x128xf32> to vector<12x128xf32>
    %cst = arith.constant dense<0.000000e+00> : vector<32x128xf32>
    %3 = tpu.matmul %0, %2, %cst {dimension_numbers = #tpu.dot_dimension_numbers<[1], [0], [0], [1], [0, 0, 1, 1], [], []>} : vector<32x12xf32>, vector<12x128xf32>, vector<32x128xf32> -> vector<32x128xf32>
    %c0_4 = arith.constant 0 : index
    %c0_5 = arith.constant 0 : index
    %4 = vector.load %arg5[%c0_4, %c0_5] : memref<32x1xf32, #tpu.memory_space<vmem>>, vector<32x1xf32>
    %5 = vector.broadcast %4 : vector<32x1xf32> to vector<32x128xf32>
    %6 = arith.addf %3, %5 : vector<32x128xf32>
    %7 = math.cos %6 : vector<32x128xf32>
    %cst_6 = arith.constant 2.500000e-01 : f32
    %8 = vector.broadcast %cst_6 : f32 to vector<32x128xf32>
    %9 = arith.mulf %8, %7 : vector<32x128xf32>
    %c0_7 = arith.constant 0 : index
    %c0_8 = arith.constant 0 : index
    %c0_9 = arith.constant 0 : index
    %10 = vector.load %arg6[%c0_7, %c0_8, %c0_9] : memref<1x32x128xf32, #tpu.memory_space<vmem>>, vector<1x32x128xf32>
    %11 = vector.shape_cast %10 : vector<1x32x128xf32> to vector<32x128xf32>
    %12 = vector.shape_cast %9 : vector<32x128xf32> to vector<1x32x128xf32>
    tpu.vector_store %arg6[%c0_7, %c0_8, %c0_9], %12 {strides = array<i32>} : memref<1x32x128xf32, #tpu.memory_space<vmem>>, vector<1x32x128xf32>,
    return
  }
  func.func @transform_0(%arg0: i32, %arg1: i32, %arg2: i32) -> (i32, i32, i32) {
    %c0_i32 = arith.constant 0 : i32
    %c0_i32_0 = arith.constant 0 : i32
    return %arg0, %c0_i32, %arg1 : i32, i32, i32
  }
  func.func @transform_1(%arg0: i32, %arg1: i32, %arg2: i32) -> (i32, i32) {
    %c0_i32 = arith.constant 0 : i32
    %c0_i32_0 = arith.constant 0 : i32
    return %arg2, %c0_i32 : i32, i32
  }
  func.func @transform_2(%arg0: i32, %arg1: i32, %arg2: i32) -> (i32, i32) {
    %c0_i32 = arith.constant 0 : i32
    %c0_i32_0 = arith.constant 0 : i32
    return %arg2, %c0_i32 : i32, i32
  }
  func.func @transform_3(%arg0: i32, %arg1: i32, %arg2: i32) -> (i32, i32, i32) {
    %c0_i32 = arith.constant 0 : i32
    return %arg0, %arg2, %arg1 : i32, i32, i32
  }
}

</mosaic_0001>

<llo_original>
// kernel: tpu_custom_call.1
$region0: #{tpu_custom_call.1}
  #allocation0 [shape = 'u32[]', space=smem, size = 0x4, offset = 0x4, fixed_abs, tag = 'smem constant byte address 0x4 - core index']
  #allocation1 [shape = 'u32[144,128]{1,0:T(1,128)}', space=vmem, size = 0x12000, scoped, tag = 'internal scratch']
  %s0 = inlined_call_operand.vmem [shape: f32[2,12,128], index: 0, kind: input, shape index: {}]
  %s1 = inlined_call_operand.vmem [shape: f32[32,12], index: 1, kind: input, shape index: {}]
  %s2 = inlined_call_operand.vmem [shape: f32[32,1], index: 2, kind: input, shape index: {}]
  %s3 = inlined_call_operand.hbm [shape: f32[2,32,128], index: 3, kind: output, shape index: {}]
  %s4 = sld [smem:[#allocation0]]
  $region45: #{tpu_custom_call.1} parent=0
    _
  %s6 = ssub.s32 1, %s4
  %s7 = scalar_select 0, %s6, %s4
  $region1: #{tpu_custom_call.1} parent=0
    #allocation2 [shape = 'u8[32768]{0}', space=vmem, size = 0x8000, scoped, tag = 'output window, operand 0']
    #allocation3 [shape = 's32[2]{0}', space=sflag, size = 0x8, scoped, tag = 'scoped memory for tpu_custom_call.1']
    %8 = vsyncpa [#allocation3], 0
    %s9 = scalar_lea.sflag [#allocation3], 1
    %10 = vsyncpa %s9, 0
    loop: start=0, step=1, limit=4
    $region2: #{tpu_custom_call.1} parent=1 // loop_pre_header
      _
    $region3: #{tpu_custom_call.1} parent=1 // loop_header
      %s12 = sphi 0, %s16
      %p13 = scmp.ge.s32.totalorder %s12, 4
      %s19 = sphi 0, %s38
      %s20 = sphi 0, %s34
      %s21 = sphi 0, %s30
      %s22 = sphi 0, %s19
      %s23 = sphi 0, %s20
      %s24 = sphi 0, %s21
      %s25 = sphi 0, %s22
      %s26 = sphi 0, %s23
      %s27 = sphi 0, %s24
      %s43 = sphi 0, %s45
      %s46 = sphi 0, %s43
      %s47 = sphi 0, %s46
      %s63 = sphi 0, %s47
      %s69 = sphi 0, %s71
      %s72 = sphi 0, %s69
      %s73 = sphi 0, %s72
      %s89 = sphi 0, %s73
      %s95 = sphi 0, %s97
      %s98 = sphi 0, %s95
      %s99 = sphi 0, %s98
      %s115 = sphi 0, %s99
      %s125 = sphi 0, %s127
      %s128 = sphi 0, %s125
      %s129 = sphi 0, %s128
      %s145 = sphi 0, %s129
    $region4: #{tpu_custom_call.1} parent=1 // loop_header_branch
      %15 = sbr.rel (%p13) target = $region8
    $region5: #{tpu_custom_call.1} parent=1 // loop_body
      %s17 = ssub.s32 %s12, 1
      %s18 = ssub.s32 %s12, 2
      %s28 = sadd.s32 1, %s21
      %p29 = scmp.ge.s32.totalorder %s28, 1
      %s30 = scalar_select %p29, 0, %s28
      %s31 = sadd.s32 1, %s20
      %s32 = scalar_select %p29, %s31, %s20
      %p33 = scmp.ge.s32.totalorder %s32, 1
      %s34 = scalar_select %p33, 0, %s32
      %s35 = sadd.s32 1, %s19
      %s36 = scalar_select %p33, %s35, %s19
      %p37 = scmp.ge.s32.totalorder %s36, 2
      %s38 = scalar_select %p37, 0, %s36
      %s39 = ssub.s32 %s19, %s38
      %s40 = ssub.s32 %s20, %s34
      %s41 = sor.u32 %s39, %s40
      %p42 = scmp.eq.s32.totalorder %s41, 0
      %s44 = sadd.s32 %s43, 1
      %s45 = scalar_select %p42, %s43, %s44
      %p48 = pneg %p42
      %p49 = scmp.eq.s32.totalorder %s12, 1
      %p50 = por %p48, %p49
      %p51 = scmp.ne.s32.totalorder %s43, %s46
      %p52 = scmp.eq.s32.totalorder %s12, 0
      %p53 = por %p51, %p52
      %p54 = scmp.ne.s32.totalorder %s43, %s46
      %p55 = scmp.eq.s32.totalorder %s17, 1
      %p56 = por %p54, %p55
      %p57 = scmp.ne.s32.totalorder %s46, %s47
      %p58 = scmp.eq.s32.totalorder %s17, 0
      %p59 = por %p57, %p58
      %p60 = scmp.ne.s32.totalorder %s46, %s47
      %p61 = scmp.eq.s32.totalorder %s18, 1
      %p62 = por %p60, %p61
      %p64 = scmp.ne.s32.totalorder %s47, %s63
      %p65 = scmp.eq.s32.totalorder %s18, 0
      %p66 = por %p64, %p65
      %s67 = ssub.s32 %s21, %s30
      %p68 = scmp.eq.s32.totalorder %s67, 0
      %s70 = sadd.s32 %s69, 1
      %s71 = scalar_select %p68, %s69, %s70
      %p74 = pneg %p68
      %p75 = scmp.eq.s32.totalorder %s12, 1
      %p76 = por %p74, %p75
      %p77 = scmp.ne.s32.totalorder %s69, %s72
      %p78 = scmp.eq.s32.totalorder %s12, 0
      %p79 = por %p77, %p78
      %p80 = scmp.ne.s32.totalorder %s69, %s72
      %p81 = scmp.eq.s32.totalorder %s17, 1
      %p82 = por %p80, %p81
      %p83 = scmp.ne.s32.totalorder %s72, %s73
      %p84 = scmp.eq.s32.totalorder %s17, 0
      %p85 = por %p83, %p84
      %p86 = scmp.ne.s32.totalorder %s72, %s73
      %p87 = scmp.eq.s32.totalorder %s18, 1
      %p88 = por %p86, %p87
      %p90 = scmp.ne.s32.totalorder %s73, %s89
      %p91 = scmp.eq.s32.totalorder %s18, 0
      %p92 = por %p90, %p91
      %s93 = ssub.s32 %s21, %s30
      %p94 = scmp.eq.s32.totalorder %s93, 0
      %s96 = sadd.s32 %s95, 1
      %s97 = scalar_select %p94, %s95, %s96
      %p100 = pneg %p94
      %p101 = scmp.eq.s32.totalorder %s12, 1
      %p102 = por %p100, %p101
      %p103 = scmp.ne.s32.totalorder %s95, %s98
      %p104 = scmp.eq.s32.totalorder %s12, 0
      %p105 = por %p103, %p104
      %p106 = scmp.ne.s32.totalorder %s95, %s98
      %p107 = scmp.eq.s32.totalorder %s17, 1
      %p108 = por %p106, %p107
      %p109 = scmp.ne.s32.totalorder %s98, %s99
      %p110 = scmp.eq.s32.totalorder %s17, 0
      %p111 = por %p109, %p110
      %p112 = scmp.ne.s32.totalorder %s98, %s99
      %p113 = scmp.eq.s32.totalorder %s18, 1
      %p114 = por %p112, %p113
      %p116 = scmp.ne.s32.totalorder %s99, %s115
      %p117 = scmp.eq.s32.totalorder %s18, 0
      %p118 = por %p116, %p117
      %s119 = ssub.s32 %s19, %s38
      %s120 = ssub.s32 %s21, %s30
      %s121 = sor.u32 %s119, %s120
      %s122 = ssub.s32 %s20, %s34
      %s123 = sor.u32 %s121, %s122
      %p124 = scmp.eq.s32.totalorder %s123, 0
      %s126 = sadd.s32 %s125, 1
      %s127 = scalar_select %p124, %s125, %s126
      %p130 = pneg %p124
      %p131 = scmp.eq.s32.totalorder %s12, 1
      %p132 = por %p130, %p131
      %p133 = scmp.ne.s32.totalorder %s125, %s128
      %p134 = scmp.eq.s32.totalorder %s12, 0
      %p135 = por %p133, %p134
      %p136 = scmp.ne.s32.totalorder %s125, %s128
      %p137 = scmp.eq.s32.totalorder %s17, 1
      %p138 = por %p136, %p137
      %p139 = scmp.ne.s32.totalorder %s128, %s129
      %p140 = scmp.eq.s32.totalorder %s17, 0
      %p141 = por %p139, %p140
      %p142 = scmp.ne.s32.totalorder %s128, %s129
      %p143 = scmp.eq.s32.totalorder %s18, 1
      %p144 = por %p142, %p143
      %p146 = scmp.ne.s32.totalorder %s129, %s145
      %p147 = scmp.eq.s32.totalorder %s18, 0
      %p148 = por %p146, %p147
      %p149 = scmp.le.s32.totalorder 1, %s12
      %p150 = scmp.lt.s32.totalorder %s12, 3
      %p151 = pnand %p149, %p150
      %p152 = pneg %p151
      // Predicated region
      $region9: #{tpu_custom_call.1} parent=5 // pred_check
        _
      $region10: #{tpu_custom_call.1} parent=5 // pred_check_branch
        %154 = sbr.rel (%p151) target = $region12
      $region11: #{tpu_custom_call.1} parent=5 // pred_region
        %s155 = ssub.s32 %s12, 1
        // Predicated region
        $region13: #{tpu_custom_call.1} parent=11 // pred_check
          %p156 = pneg %p85
        $region14: #{tpu_custom_call.1} parent=11 // pred_check_branch
          %158 = sbr.rel (%p156) target = $region16
        $region15: #{tpu_custom_call.1} parent=11 // pred_region
          %s159 = smul.u32 4, %s24
          %p160 = scmp.lt.s32.totalorder %s159, 3
          %s161 = scalar_select %p160, %s159, 3
          %s162 = smul.addr %s161, 8
          %s163 = scalar_lea.vmem %s1, %s162
          %s164 = smul.u32 4, %s24
        $region16: #{tpu_custom_call.1} parent=11 // pred_fallthru
          _
        // Predicated region
        $region17: #{tpu_custom_call.1} parent=11 // pred_check
          %p165 = pneg %p111
        $region18: #{tpu_custom_call.1} parent=11 // pred_check_branch
          %167 = sbr.rel (%p165) target = $region20
        $region19: #{tpu_custom_call.1} parent=11 // pred_region
          %s168 = smul.u32 4, %s24
          %p169 = scmp.lt.s32.totalorder %s168, 3
          %s170 = scalar_select %p169, %s168, 3
          %s171 = smul.addr %s170, 8
          %s172 = scalar_lea.vmem %s2, %s171
          %s173 = smul.u32 4, %s24
        $region20: #{tpu_custom_call.1} parent=11 // pred_fallthru
          _
      $region12: #{tpu_custom_call.1} parent=5 // pred_fallthru
        _
      %p174 = scmp.lt.s32.totalorder %s12, 2
      // Predicated region
      $region21: #{tpu_custom_call.1} parent=5 // pred_check
        %p175 = pneg %p174
      $region22: #{tpu_custom_call.1} parent=5 // pred_check_branch
        %177 = sbr.rel (%p175) target = $region24
      $region23: #{tpu_custom_call.1} parent=5 // pred_region
        // Predicated region
        $region25: #{tpu_custom_call.1} parent=23 // pred_check
          %p178 = pneg %p53
        $region26: #{tpu_custom_call.1} parent=23 // pred_check_branch
          %180 = sbr.rel (%p178) target = $region28
        $region27: #{tpu_custom_call.1} parent=23 // pred_region
          %p181 = scmp.lt.s32.totalorder %s19, 1
          %s182 = scalar_select %p181, %s19, 1
          %p183 = scmp.lt.s32.totalorder %s20, 0
          %s184 = scalar_select %p183, %s20, 0
          %s185 = smul.addr %s182, 2
          %s186 = sadd.s32 %s184, %s185
          %s187 = smul.addr %s186, 8
          %s188 = scalar_lea.vmem %s0, %s187
        $region28: #{tpu_custom_call.1} parent=23 // pred_fallthru
          _
      $region24: #{tpu_custom_call.1} parent=5 // pred_fallthru
        _
      %p189 = scmp.le.s32.totalorder 1, %s12
      %p190 = scmp.lt.s32.totalorder %s12, 3
      %p191 = pnand %p189, %p190
      %p192 = pneg %p191
      // Predicated region
      $region29: #{tpu_custom_call.1} parent=5 // pred_check
        _
      $region30: #{tpu_custom_call.1} parent=5 // pred_check_branch
        %194 = sbr.rel (%p191) target = $region32
      $region31: #{tpu_custom_call.1} parent=5 // pred_region
        %s195 = ssub.s32 %s12, 1
        %p196 = scmp.lt.s32.totalorder %s22, 1
        %s197 = scalar_select %p196, %s22, 1
        %p198 = scmp.lt.s32.totalorder %s23, 0
        %s199 = scalar_select %p198, %s23, 0
        %s200 = smul.addr %s197, 2
        %s201 = sadd.s32 %s199, %s200
        %s202 = smul.addr %s201, 8
        %s203 = scalar_lea.vmem %s0, %s202
        %p204 = pneg %p59
        %p205 = pneg %p56
        %s206 = smul.u32 4, %s24
        %p207 = scmp.lt.s32.totalorder %s206, 3
        %s208 = scalar_select %p207, %s206, 3
        %s209 = smul.addr %s208, 8
        %s210 = scalar_lea.vmem %s1, %s209
        %p211 = pneg %p85
        %p212 = pneg %p82
        %s213 = smul.u32 4, %s24
        %p214 = scmp.lt.s32.totalorder %s213, 3
        %s215 = scalar_select %p214, %s213, 3
        %s216 = smul.addr %s215, 8
        %s217 = scalar_lea.vmem %s2, %s216
        %p218 = pneg %p111
        %p219 = pneg %p108
        %p220 = pneg %p141
        %p221 = pneg %p138
        %s222 = sand.u32 %s128, 1
        %s223 = scalar_lea.sflag [#allocation3], %s222
        %s224 = sand.u32 %s128, 1
        %s225 = smul.addr %s224, 32
        %s226 = scalar_lea.vmem [#allocation2], %s225
        %p227 = scmp.lt.s32.totalorder %s22, 1
        %s228 = scalar_select %p227, %s22, 1
        %p229 = scmp.lt.s32.totalorder %s23, 0
        %s230 = scalar_select %p229, %s23, 0
        %s231 = smul.addr %s228, 2
        %s232 = sadd.s32 %s230, %s231
        %s233 = smul.addr %s232, 8
        %s234 = scalar_lea.vmem %s0, %s233
        %s235 = smul.u32 4, %s24
        %p236 = scmp.lt.s32.totalorder %s235, 3
        %s237 = scalar_select %p236, %s235, 3
        %s238 = smul.addr %s237, 8
        %s239 = scalar_lea.vmem %s1, %s238
        %s240 = smul.u32 4, %s24
        %s241 = smul.u32 4, %s24
        %p242 = scmp.lt.s32.totalorder %s241, 3
        %s243 = scalar_select %p242, %s241, 3
        %s244 = smul.addr %s243, 8
        %s245 = scalar_lea.vmem %s2, %s244
        %s246 = smul.u32 4, %s24
        %s247 = smul.u32 4, %s24
        %v248 = vld [vmem:[%s239] sm:$0xff]
        %v249 = vld [vmem:[%s239 + $0x8] sm:$0xff]
        %v250 = vld [vmem:[%s239 + $0x10] sm:$0xff]
        %v251 = vld [vmem:[%s239 + $0x18] sm:$0xff]
        %v252 = vld [vmem:[%s234] sm:$0xff]
        %v253 = vld [vmem:[%s234 + $0x8] sm:$0xf]
        %v254 = vld [vmem:[%s245] sm:$0xff]
        %v255 = vld [vmem:[%s245 + $0x8] sm:$0xff]
        %v256 = vld [vmem:[%s245 + $0x10] sm:$0xff]
        %v257 = vld [vmem:[%s245 + $0x18] sm:$0xff]
        %259 = vset.pattern.permute.xlu0 0
        %260 = vperm.xlu0 %259, %v254
        %v261 = vpop.permute.xlu0 %260
        %264 = vset.pattern.permute.xlu0 0
        %265 = vperm.xlu0 %264, %v255
        %v266 = vpop.permute.xlu0 %265
        %269 = vset.pattern.permute.xlu0 0
        %270 = vperm.xlu0 %269, %v256
        %v271 = vpop.permute.xlu0 %270
        %274 = vset.pattern.permute.xlu0 0
        %275 = vperm.xlu0 %274, %v257
        %v276 = vpop.permute.xlu0 %275
        %vm278 = vcmask 97280
        %v280 = vsel %vm278, %v248, 0
        %v283 = vsel %vm278, %v249, 0
        %v286 = vsel %vm278, %v250, 0
        %v289 = vsel %vm278, %v251, 0
        %vm291 = vcmask 1043456
        %v293 = vsel %vm291, %v253, 0
        %295 = vmatprep.subr.mxu0 0.0
        %296 = vmatpush1.msra.mxu0 %v252
        %297 = vmatprep.subr.mxu0 0.0
        %298 = vmatpush1.msra.mxu0 %v293
        %299 = vmatprep.subr.mxu0 0.0
        %300 = vmatpush1.msra.mxu0 0.0
        %301 = vmatprep.subr.mxu0 0.0
        %302 = vmatpush1.msra.mxu0 0.0
        %303 = vmatprep.subr.mxu0 0.0
        %304 = vmatpush1.msra.mxu0 0.0
        %305 = vmatprep.subr.mxu0 0.0
        %306 = vmatpush1.msra.mxu0 0.0
        %307 = vmatprep.subr.mxu0 0.0
        %308 = vmatpush1.msra.mxu0 0.0
        %309 = vmatprep.subr.mxu0 0.0
        %310 = vmatpush1.msra.mxu0 0.0
        %311 = vmatprep.subr.mxu0 0.0
        %312 = vmatpush1.msra.mxu0 0.0
        %313 = vmatprep.subr.mxu0 0.0
        %314 = vmatpush1.msra.mxu0 0.0
        %315 = vmatprep.subr.mxu0 0.0
        %316 = vmatpush1.msra.mxu0 0.0
        %317 = vmatprep.subr.mxu0 0.0
        %318 = vmatpush1.msra.mxu0 0.0
        %319 = vmatprep.subr.mxu0 0.0
        %320 = vmatpush1.msra.mxu0 0.0
        %321 = vmatprep.subr.mxu0 0.0
        %322 = vmatpush1.msra.mxu0 0.0
        %323 = vmatprep.subr.mxu0 0.0
        %324 = vmatpush1.msra.mxu0 0.0
        %325 = vmatprep.subr.mxu0 0.0
        %326 = vmatpush1.msra.mxu0 0.0
        %327 = vmatprep.subr.mxu0 0.0
        %328 = vmatpush1.msra.mxu0 0.0
        %329 = vmatprep.subr.mxu0 0.0
        %330 = vmatpush1.msra.mxu0 0.0
        %331 = vmatprep.subr.mxu0 0.0
        %332 = vmatpush1.msra.mxu0 0.0
        %333 = vmatprep.subr.mxu0 0.0
        %334 = vmatpush1.msra.mxu0 0.0
        %335 = vmatprep.subr.mxu0 0.0
        %336 = vmatpush1.msra.mxu0 0.0
        %337 = vmatprep.subr.mxu0 0.0
        %338 = vmatpush1.msra.mxu0 0.0
        %339 = vmatprep.subr.mxu0 0.0
        %340 = vmatpush1.msra.mxu0 0.0
        %341 = vmatprep.subr.mxu0 0.0
        %342 = vmatpush1.msra.mxu0 0.0
        %343 = vmatprep.subr.mxu0 0.0
        %344 = vmatpush1.msra.mxu0 0.0
        %345 = vmatprep.subr.mxu0 0.0
        %346 = vmatpush1.msra.mxu0 0.0
        %347 = vmatprep.subr.mxu0 0.0
        %348 = vmatpush1.msra.mxu0 0.0
        %349 = vmatprep.subr.mxu0 0.0
        %350 = vmatpush1.msra.mxu0 0.0
        %351 = vmatprep.subr.mxu0 0.0
        %352 = vmatpush1.msra.mxu0 0.0
        %353 = vmatprep.subr.mxu0 0.0
        %354 = vmatpush1.msra.mxu0 0.0
        %355 = vmatprep.subr.mxu0 0.0
        %356 = vmatpush1.msra.mxu0 0.0
        %357 = vmatprep.subr.mxu0 0.0
        %358 = vmatpush1.msra.mxu0 0.0
        %359 = vmatprep.mubr.f32.mxu0 0.0
        %360 = vmatmul.mubr.f32.gmra.mrb[0].mxu0 %v280
        %v361 = vpop.f32.mrb[0].mxu0
        %v362 = vadd.f32 %v261, %v361
        %v363 = vpop.f32.mrb[0].mxu0
        %364 = vmatprep.mubr.f32.mxu0 0.0
        %365 = vmatmul.mubr.f32.gmra.mrb[0].mxu0 %v283
        %v366 = vpop.f32.mrb[0].mxu0
        %v367 = vadd.f32 %v266, %v366
        %v368 = vpop.f32.mrb[0].mxu0
        %369 = vmatprep.mubr.f32.mxu0 0.0
        %370 = vmatmul.mubr.f32.gmra.mrb[0].mxu0 %v286
        %v371 = vpop.f32.mrb[0].mxu0
        %v372 = vadd.f32 %v271, %v371
        %v373 = vpop.f32.mrb[0].mxu0
        %374 = vmatprep.mubr.f32.mxu0 0.0
        %375 = vmatmul.mubr.f32.gmra.mrb[0].mxu0 %v289
        %v376 = vpop.f32.mrb[0].mxu0
        %v377 = vadd.f32 %v276, %v376
        %v378 = vpop.f32.mrb[0].mxu0
        %379 = vdwg.mxu0
        %v380 = vand.u32 2147483647, %v362
        %vm381 = vcmp.le.f32.partialorder %v380, 0.7853982
        %vm382 = vcmp.lt.s32.totalorder %v362, 0
        %v383 = vand.u32 %v362, 2139095040
        %v384 = vshrl.u32 %v383, 23
        %v385 = vsub.s32 %v384, 127
        %v386 = vand.u32 2147483647, %v362
        %v387 = vand.u32 %v386, 8388607
        %v388 = vor.u32 %v387, 8388608
        %v389 = vsub.s32 0, %v388
        %v390 = vadd.s32 %v385, 1
        %vm391 = vcmp.gt.s32.totalorder %v390, 0
        %v392 = vsel %vm391, %v390, 0
        %v393 = vshrl.u32 %v392, 5
        %v394 = vand.u32 %v392, 31
        %v395 = vsub.s32 32, %v394
        %v396 = vshrl.u32 683565275, %v395
        %v397 = vshll.u32 683565275, %v394
        %v398 = vshrl.u32 2475754826, %v395
        %v399 = vor.u32 %v397, %v398
        %v400 = vshll.u32 2475754826, %v394
        %v401 = vshrl.u32 2131351028, %v395
        %v402 = vor.u32 %v400, %v401
        %v403 = vshll.u32 2131351028, %v394
        %v404 = vshrl.u32 2102212464, %v395
        %v405 = vor.u32 %v403, %v404
        %v406 = vshll.u32 2102212464, %v394
        %v407 = vshrl.u32 920167782, %v395
        %v408 = vor.u32 %v406, %v407
        %v409 = vshll.u32 920167782, %v394
        %v410 = vshrl.u32 1326507024, %v395
        %v411 = vor.u32 %v409, %v410
        %vm412 = vcmp.lt.s32.totalorder %v393, 1
        %vm413 = vcmp.lt.s32.totalorder %v393, 2
        %vm414 = vcmp.lt.s32.totalorder %v393, 3
        %vm415 = vcmp.lt.s32.totalorder %v393, 4
        %v416 = vsel %vm412, %v396, %v399
        %v417 = vsel %vm415, %v405, 2102212464
        %v418 = vsel %vm414, %v402, %v417
        %v419 = vsel %vm413, %v416, %v418
        %v420 = vsel %vm412, %v399, %v402
        %v421 = vsel %vm415, %v408, 920167782
        %v422 = vsel %vm414, %v405, %v421
        %v423 = vsel %vm413, %v420, %v422
        %v424 = vsel %vm412, %v402, %v405
        %v425 = vsel %vm415, %v411, 1326507024
        %v426 = vsel %vm414, %v408, %v425
        %v427 = vsel %vm413, %v424, %v426
        %v428 = vshll.u32 %v388, 8
        %v429 = vmul.u32.u64.compose %v428, %v427
        %v430 = vextract.low.u32 %v429
        %v431 = vextract.high.u32 %v429
        %v432 = vmul.u32.u64.compose %v428, %v423
        %v433 = vextract.low.u32 %v432
        %v434 = vextract.high.u32 %v432
        %v435 = vmul.u32 %v428, %v419
        %v436 = vadd.s32 %v431, %v433
        %vm437 = vc.u32 %v431, %v433
        %v438 = vadd.s32 %v434, 1
        %v439 = vsel %vm437, %v438, %v434
        %v440 = vadd.s32 %v435, %v439
        %v441 = vadd.s32 %v440, 536870912
        %v442 = vshrl.u32 %v441, 30
        %v443 = vshll.u32 %v442, 30
        %v444 = vsub.s32 %v440, %v443
        %vm445 = vcmp.lt.s32.totalorder %v444, 0
        %v446 = vsub.s32 0, %v444
        %v447 = vsel %vm445, %v446, %v444
        %v448 = vclz %v447
        %v449 = vsub.s32 %v448, 2
        %vm450 = vcmp.gt.s32.totalorder 0, %v449
        %v451 = vsel %vm450, 0, %v449
        %v452 = vsub.s32 32, %v451
        %v453 = vshll.u32 %v444, %v451
        %v454 = vshrl.u32 %v436, %v452
        %v455 = vor.u32 %v453, %v454
        %v456 = vsub.s32 4294967266, %v451
        %v457 = vadd.s32 %v456, 127
        %v458 = vshll.u32 %v457, 23
        %v459 = vor.u32 4788187, %v458
        %v460 = vand.u32 2147483647, %v459
        %v462 = vcvt.s32.f32 %v455
        %v463 = vmul.f32 %v462, %v460
        %v464 = vxor.u32 %v463, 2147483648
        %v465 = vsel %vm382, %v464, %v463
        %v466 = vsub.s32 4, %v442
        %v467 = vsel %vm382, %v466, %v442
        %v468 = vsel %vm381, %v362, %v465
        %v469 = vsel %vm381, 0, %v467
        %v470 = vcosq.f32.pop %v468
        %v471 = vsinq.f32.pop %v468
        %vm472 = vweird.f32 %v362
        %v473 = vand.u32 %v469, 3
        %vm474 = vcmp.lt.s32.totalorder %v473, 2
        %vm475 = vcmp.eq.s32.totalorder %v473, 0
        %v476 = vxor.u32 %v471, 2147483648
        %v477 = vsel %vm475, %v470, %v476
        %vm478 = vcmp.eq.s32.totalorder %v473, 2
        %v479 = vxor.u32 %v470, 2147483648
        %v480 = vsel %vm478, %v479, %v471
        %v481 = vsel %vm474, %v477, %v480
        %v482 = vsel %vm472, nan, %v481
        %v483 = vand.u32 2147483647, %v367
        %vm484 = vcmp.le.f32.partialorder %v483, 0.7853982
        %vm485 = vcmp.lt.s32.totalorder %v367, 0
        %v486 = vand.u32 %v367, 2139095040
        %v487 = vshrl.u32 %v486, 23
        %v488 = vsub.s32 %v487, 127
        %v489 = vand.u32 2147483647, %v367
        %v490 = vand.u32 %v489, 8388607
        %v491 = vor.u32 %v490, 8388608
        %v492 = vsub.s32 0, %v491
        %v493 = vadd.s32 %v488, 1
        %vm494 = vcmp.gt.s32.totalorder %v493, 0
        %v495 = vsel %vm494, %v493, 0
        %v496 = vshrl.u32 %v495, 5
        %v497 = vand.u32 %v495, 31
        %v498 = vsub.s32 32, %v497
        %v499 = vshrl.u32 683565275, %v498
        %v500 = vshll.u32 683565275, %v497
        %v501 = vshrl.u32 2475754826, %v498
        %v502 = vor.u32 %v500, %v501
        %v503 = vshll.u32 2475754826, %v497
        %v504 = vshrl.u32 2131351028, %v498
        %v505 = vor.u32 %v503, %v504
        %v506 = vshll.u32 2131351028, %v497
        %v507 = vshrl.u32 2102212464, %v498
        %v508 = vor.u32 %v506, %v507
        %v509 = vshll.u32 2102212464, %v497
        %v510 = vshrl.u32 920167782, %v498
        %v511 = vor.u32 %v509, %v510
        %v512 = vshll.u32 920167782, %v497
        %v513 = vshrl.u32 1326507024, %v498
        %v514 = vor.u32 %v512, %v513
        %vm515 = vcmp.lt.s32.totalorder %v496, 1
        %vm516 = vcmp.lt.s32.totalorder %v496, 2
        %vm517 = vcmp.lt.s32.totalorder %v496, 3
        %vm518 = vcmp.lt.s32.totalorder %v496, 4
        %v519 = vsel %vm515, %v499, %v502
        %v520 = vsel %vm518, %v508, 2102212464
        %v521 = vsel %vm517, %v505, %v520
        %v522 = vsel %vm516, %v519, %v521
        %v523 = vsel %vm515, %v502, %v505
        %v524 = vsel %vm518, %v511, 920167782
        %v525 = vsel %vm517, %v508, %v524
        %v526 = vsel %vm516, %v523, %v525
        %v527 = vsel %vm515, %v505, %v508
        %v528 = vsel %vm518, %v514, 1326507024
        %v529 = vsel %vm517, %v511, %v528
        %v530 = vsel %vm516, %v527, %v529
        %v531 = vshll.u32 %v491, 8
        %v532 = vmul.u32.u64.compose %v531, %v530
        %v533 = vextract.low.u32 %v532
        %v534 = vextract.high.u32 %v532
        %v535 = vmul.u32.u64.compose %v531, %v526
        %v536 = vextract.low.u32 %v535
        %v537 = vextract.high.u32 %v535
        %v538 = vmul.u32 %v531, %v522
        %v539 = vadd.s32 %v534, %v536
        %vm540 = vc.u32 %v534, %v536
        %v541 = vadd.s32 %v537, 1
        %v542 = vsel %vm540, %v541, %v537
        %v543 = vadd.s32 %v538, %v542
        %v544 = vadd.s32 %v543, 536870912
        %v545 = vshrl.u32 %v544, 30
        %v546 = vshll.u32 %v545, 30
        %v547 = vsub.s32 %v543, %v546
        %vm548 = vcmp.lt.s32.totalorder %v547, 0
        %v549 = vsub.s32 0, %v547
        %v550 = vsel %vm548, %v549, %v547
        %v551 = vclz %v550
        %v552 = vsub.s32 %v551, 2
        %vm553 = vcmp.gt.s32.totalorder 0, %v552
        %v554 = vsel %vm553, 0, %v552
        %v555 = vsub.s32 32, %v554
        %v556 = vshll.u32 %v547, %v554
        %v557 = vshrl.u32 %v539, %v555
        %v558 = vor.u32 %v556, %v557
        %v559 = vsub.s32 4294967266, %v554
        %v560 = vadd.s32 %v559, 127
        %v561 = vshll.u32 %v560, 23
        %v562 = vor.u32 4788187, %v561
        %v563 = vand.u32 2147483647, %v562
        %v565 = vcvt.s32.f32 %v558
        %v566 = vmul.f32 %v565, %v563
        %v567 = vxor.u32 %v566, 2147483648
        %v568 = vsel %vm485, %v567, %v566
        %v569 = vsub.s32 4, %v545
        %v570 = vsel %vm485, %v569, %v545
        %v571 = vsel %vm484, %v367, %v568
        %v572 = vsel %vm484, 0, %v570
        %v573 = vcosq.f32.pop %v571
        %v574 = vsinq.f32.pop %v571
        %vm575 = vweird.f32 %v367
        %v576 = vand.u32 %v572, 3
        %vm577 = vcmp.lt.s32.totalorder %v576, 2
        %vm578 = vcmp.eq.s32.totalorder %v576, 0
        %v579 = vxor.u32 %v574, 2147483648
        %v580 = vsel %vm578, %v573, %v579
        %vm581 = vcmp.eq.s32.totalorder %v576, 2
        %v582 = vxor.u32 %v573, 2147483648
        %v583 = vsel %vm581, %v582, %v574
        %v584 = vsel %vm577, %v580, %v583
        %v585 = vsel %vm575, nan, %v584
        %v586 = vand.u32 2147483647, %v372
        %vm587 = vcmp.le.f32.partialorder %v586, 0.7853982
        %vm588 = vcmp.lt.s32.totalorder %v372, 0
        %v589 = vand.u32 %v372, 2139095040
        %v590 = vshrl.u32 %v589, 23
        %v591 = vsub.s32 %v590, 127
        %v592 = vand.u32 2147483647, %v372
        %v593 = vand.u32 %v592, 8388607
        %v594 = vor.u32 %v593, 8388608
        %v595 = vsub.s32 0, %v594
        %v596 = vadd.s32 %v591, 1
        %vm597 = vcmp.gt.s32.totalorder %v596, 0
        %v598 = vsel %vm597, %v596, 0
        %v599 = vshrl.u32 %v598, 5
        %v600 = vand.u32 %v598, 31
        %v601 = vsub.s32 32, %v600
        %v602 = vshrl.u32 683565275, %v601
        %v603 = vshll.u32 683565275, %v600
        %v604 = vshrl.u32 2475754826, %v601
        %v605 = vor.u32 %v603, %v604
        %v606 = vshll.u32 2475754826, %v600
        %v607 = vshrl.u32 2131351028, %v601
        %v608 = vor.u32 %v606, %v607
        %v609 = vshll.u32 2131351028, %v600
        %v610 = vshrl.u32 2102212464, %v601
        %v611 = vor.u32 %v609, %v610
        %v612 = vshll.u32 2102212464, %v600
        %v613 = vshrl.u32 920167782, %v601
        %v614 = vor.u32 %v612, %v613
        %v615 = vshll.u32 920167782, %v600
        %v616 = vshrl.u32 1326507024, %v601
        %v617 = vor.u32 %v615, %v616
        %vm618 = vcmp.lt.s32.totalorder %v599, 1
        %vm619 = vcmp.lt.s32.totalorder %v599, 2
        %vm620 = vcmp.lt.s32.totalorder %v599, 3
        %vm621 = vcmp.lt.s32.totalorder %v599, 4
        %v622 = vsel %vm618, %v602, %v605
        %v623 = vsel %vm621, %v611, 2102212464
        %v624 = vsel %vm620, %v608, %v623
        %v625 = vsel %vm619, %v622, %v624
        %v626 = vsel %vm618, %v605, %v608
        %v627 = vsel %vm621, %v614, 920167782
        %v628 = vsel %vm620, %v611, %v627
        %v629 = vsel %vm619, %v626, %v628
        %v630 = vsel %vm618, %v608, %v611
        %v631 = vsel %vm621, %v617, 1326507024
        %v632 = vsel %vm620, %v614, %v631
        %v633 = vsel %vm619, %v630, %v632
        %v634 = vshll.u32 %v594, 8
        %v635 = vmul.u32.u64.compose %v634, %v633
        %v636 = vextract.low.u32 %v635
        %v637 = vextract.high.u32 %v635
        %v638 = vmul.u32.u64.compose %v634, %v629
        %v639 = vextract.low.u32 %v638
        %v640 = vextract.high.u32 %v638
        %v641 = vmul.u32 %v634, %v625
        %v642 = vadd.s32 %v637, %v639
        %vm643 = vc.u32 %v637, %v639
        %v644 = vadd.s32 %v640, 1
        %v645 = vsel %vm643, %v644, %v640
        %v646 = vadd.s32 %v641, %v645
        %v647 = vadd.s32 %v646, 536870912
        %v648 = vshrl.u32 %v647, 30
        %v649 = vshll.u32 %v648, 30
        %v650 = vsub.s32 %v646, %v649
        %vm651 = vcmp.lt.s32.totalorder %v650, 0
        %v652 = vsub.s32 0, %v650
        %v653 = vsel %vm651, %v652, %v650
        %v654 = vclz %v653
        %v655 = vsub.s32 %v654, 2
        %vm656 = vcmp.gt.s32.totalorder 0, %v655
        %v657 = vsel %vm656, 0, %v655
        %v658 = vsub.s32 32, %v657
        %v659 = vshll.u32 %v650, %v657
        %v660 = vshrl.u32 %v642, %v658
        %v661 = vor.u32 %v659, %v660
        %v662 = vsub.s32 4294967266, %v657
        %v663 = vadd.s32 %v662, 127
        %v664 = vshll.u32 %v663, 23
        %v665 = vor.u32 4788187, %v664
        %v666 = vand.u32 2147483647, %v665
        %v668 = vcvt.s32.f32 %v661
        %v669 = vmul.f32 %v668, %v666
        %v670 = vxor.u32 %v669, 2147483648
        %v671 = vsel %vm588, %v670, %v669
        %v672 = vsub.s32 4, %v648
        %v673 = vsel %vm588, %v672, %v648
        %v674 = vsel %vm587, %v372, %v671
        %v675 = vsel %vm587, 0, %v673
        %v676 = vcosq.f32.pop %v674
        %v677 = vsinq.f32.pop %v674
        %vm678 = vweird.f32 %v372
        %v679 = vand.u32 %v675, 3
        %vm680 = vcmp.lt.s32.totalorder %v679, 2
        %vm681 = vcmp.eq.s32.totalorder %v679, 0
        %v682 = vxor.u32 %v677, 2147483648
        %v683 = vsel %vm681, %v676, %v682
        %vm684 = vcmp.eq.s32.totalorder %v679, 2
        %v685 = vxor.u32 %v676, 2147483648
        %v686 = vsel %vm684, %v685, %v677
        %v687 = vsel %vm680, %v683, %v686
        %v688 = vsel %vm678, nan, %v687
        %v689 = vand.u32 2147483647, %v377
        %vm690 = vcmp.le.f32.partialorder %v689, 0.7853982
        %vm691 = vcmp.lt.s32.totalorder %v377, 0
        %v692 = vand.u32 %v377, 2139095040
        %v693 = vshrl.u32 %v692, 23
        %v694 = vsub.s32 %v693, 127
        %v695 = vand.u32 2147483647, %v377
        %v696 = vand.u32 %v695, 8388607
        %v697 = vor.u32 %v696, 8388608
        %v698 = vsub.s32 0, %v697
        %v699 = vadd.s32 %v694, 1
        %vm700 = vcmp.gt.s32.totalorder %v699, 0
        %v701 = vsel %vm700, %v699, 0
        %v702 = vshrl.u32 %v701, 5
        %v703 = vand.u32 %v701, 31
        %v704 = vsub.s32 32, %v703
        %v705 = vshrl.u32 683565275, %v704
        %v706 = vshll.u32 683565275, %v703
        %v707 = vshrl.u32 2475754826, %v704
        %v708 = vor.u32 %v706, %v707
        %v709 = vshll.u32 2475754826, %v703
        %v710 = vshrl.u32 2131351028, %v704
        %v711 = vor.u32 %v709, %v710
        %v712 = vshll.u32 2131351028, %v703
        %v713 = vshrl.u32 2102212464, %v704
        %v714 = vor.u32 %v712, %v713
        %v715 = vshll.u32 2102212464, %v703
        %v716 = vshrl.u32 920167782, %v704
        %v717 = vor.u32 %v715, %v716
        %v718 = vshll.u32 920167782, %v703
        %v719 = vshrl.u32 1326507024, %v704
        %v720 = vor.u32 %v718, %v719
        %vm721 = vcmp.lt.s32.totalorder %v702, 1
        %vm722 = vcmp.lt.s32.totalorder %v702, 2
        %vm723 = vcmp.lt.s32.totalorder %v702, 3
        %vm724 = vcmp.lt.s32.totalorder %v702, 4
        %v725 = vsel %vm721, %v705, %v708
        %v726 = vsel %vm724, %v714, 2102212464
        %v727 = vsel %vm723, %v711, %v726
        %v728 = vsel %vm722, %v725, %v727
        %v729 = vsel %vm721, %v708, %v711
        %v730 = vsel %vm724, %v717, 920167782
        %v731 = vsel %vm723, %v714, %v730
        %v732 = vsel %vm722, %v729, %v731
        %v733 = vsel %vm721, %v711, %v714
        %v734 = vsel %vm724, %v720, 1326507024
        %v735 = vsel %vm723, %v717, %v734
        %v736 = vsel %vm722, %v733, %v735
        %v737 = vshll.u32 %v697, 8
        %v738 = vmul.u32.u64.compose %v737, %v736
        %v739 = vextract.low.u32 %v738
        %v740 = vextract.high.u32 %v738
        %v741 = vmul.u32.u64.compose %v737, %v732
        %v742 = vextract.low.u32 %v741
        %v743 = vextract.high.u32 %v741
        %v744 = vmul.u32 %v737, %v728
        %v745 = vadd.s32 %v740, %v742
        %vm746 = vc.u32 %v740, %v742
        %v747 = vadd.s32 %v743, 1
        %v748 = vsel %vm746, %v747, %v743
        %v749 = vadd.s32 %v744, %v748
        %v750 = vadd.s32 %v749, 536870912
        %v751 = vshrl.u32 %v750, 30
        %v752 = vshll.u32 %v751, 30
        %v753 = vsub.s32 %v749, %v752
        %vm754 = vcmp.lt.s32.totalorder %v753, 0
        %v755 = vsub.s32 0, %v753
        %v756 = vsel %vm754, %v755, %v753
        %v757 = vclz %v756
        %v758 = vsub.s32 %v757, 2
        %vm759 = vcmp.gt.s32.totalorder 0, %v758
        %v760 = vsel %vm759, 0, %v758
        %v761 = vsub.s32 32, %v760
        %v762 = vshll.u32 %v753, %v760
        %v763 = vshrl.u32 %v745, %v761
        %v764 = vor.u32 %v762, %v763
        %v765 = vsub.s32 4294967266, %v760
        %v766 = vadd.s32 %v765, 127
        %v767 = vshll.u32 %v766, 23
        %v768 = vor.u32 4788187, %v767
        %v769 = vand.u32 2147483647, %v768
        %v771 = vcvt.s32.f32 %v764
        %v772 = vmul.f32 %v771, %v769
        %v773 = vxor.u32 %v772, 2147483648
        %v774 = vsel %vm691, %v773, %v772
        %v775 = vsub.s32 4, %v751
        %v776 = vsel %vm691, %v775, %v751
        %v777 = vsel %vm690, %v377, %v774
        %v778 = vsel %vm690, 0, %v776
        %v779 = vcosq.f32.pop %v777
        %v780 = vsinq.f32.pop %v777
        %vm781 = vweird.f32 %v377
        %v782 = vand.u32 %v778, 3
        %vm783 = vcmp.lt.s32.totalorder %v782, 2
        %vm784 = vcmp.eq.s32.totalorder %v782, 0
        %v785 = vxor.u32 %v780, 2147483648
        %v786 = vsel %vm784, %v779, %v785
        %vm787 = vcmp.eq.s32.totalorder %v782, 2
        %v788 = vxor.u32 %v779, 2147483648
        %v789 = vsel %vm787, %v788, %v780
        %v790 = vsel %vm783, %v786, %v789
        %v791 = vsel %vm781, nan, %v790
        %v792 = vmul.f32 %v482, 0.25
        %v793 = vmul.f32 %v585, 0.25
        %v794 = vmul.f32 %v688, 0.25
        %v795 = vmul.f32 %v791, 0.25
        %796 = vst [vmem:[%s226] sm:$0xff] %v792
        %797 = vst [vmem:[%s226 + $0x8] sm:$0xff] %v793
        %798 = vst [vmem:[%s226 + $0x10] sm:$0xff] %v794
        %799 = vst [vmem:[%s226 + $0x18] sm:$0xff] %v795
        %s800 = sand.u32 %s128, 1
        %s801 = scalar_lea.sflag [#allocation3], %s800
        %s802 = sand.u32 %s128, 1
        %s803 = smul.addr %s802, 32
        %s804 = scalar_lea.vmem [#allocation2], %s803
        // Predicated region
        $region33: #{tpu_custom_call.1} parent=31 // pred_check
          %p805 = pneg %p138
        $region34: #{tpu_custom_call.1} parent=31 // pred_check_branch
          %807 = sbr.rel (%p805) target = $region36
        $region35: #{tpu_custom_call.1} parent=31 // pred_region
          %s808 = smul.u32 4, %s24
          %s810 = ssub.s32 512, 512
          %811 = vsyncadd %s801, %s810
          %s812 = sadd.s32 %s23, %s808
          %s813 = smul.addr %s22, 4
          %s814 = sadd.s32 %s812, %s813
          %s815 = smul.addr %s814, 128
          %s816 = scalar_lea.hbm %s3, %s815
          %s817 = sshll.u32 %s804, 4
          %s818 = int_to_ptr.vmem [resolvable:$true] %s817
          %823 = dma.vmem_to_hbm [thread:$0]  %s818, 512, %s816, %s801, 128, 128, 8
        $region36: #{tpu_custom_call.1} parent=31 // pred_fallthru
          _
      $region32: #{tpu_custom_call.1} parent=5 // pred_fallthru
        _
      %p824 = scmp.le.s32.totalorder 2, %s12
      // Predicated region
      $region37: #{tpu_custom_call.1} parent=5 // pred_check
        %p825 = pneg %p824
      $region38: #{tpu_custom_call.1} parent=5 // pred_check_branch
        %827 = sbr.rel (%p825) target = $region40
      $region39: #{tpu_custom_call.1} parent=5 // pred_region
        %s828 = ssub.s32 %s12, 2
        // Predicated region
        $region41: #{tpu_custom_call.1} parent=39 // pred_check
          %p829 = pneg %p144
        $region42: #{tpu_custom_call.1} parent=39 // pred_check_branch
          %831 = sbr.rel (%p829) target = $region44
        $region43: #{tpu_custom_call.1} parent=39 // pred_region
          %s832 = sand.u32 %s129, 1
          %s833 = scalar_lea.sflag [#allocation3], %s832
          %s834 = sand.u32 %s129, 1
          %s835 = smul.addr %s834, 32
          %s836 = scalar_lea.vmem [#allocation2], %s835
          %837 = dma.done %s833, 512
        $region44: #{tpu_custom_call.1} parent=39 // pred_fallthru
          _
      $region40: #{tpu_custom_call.1} parent=5 // pred_fallthru
        _
    $region6: #{tpu_custom_call.1} parent=1 // loop_footer
      %s16 = sadd.s32 1, %s12
    $region7: #{tpu_custom_call.1} parent=1 // loop_footer_branch
      %11 = sbr.rel target = $region3
    $region8: #{tpu_custom_call.1} parent=1 // loop_exit
      _
    %838 = vsyncpa [#allocation3], 1
    %s839 = scalar_lea.sflag [#allocation3], 1
    %840 = vsyncpa %s839, 1

</llo_original>
